<compile_context>
chip_gen: v7x
topology: tpu7x:2x2x1
jax: 0.10.0
libtpu: 0.0.40
codegen_flags: <defaults>
</compile_context>

<pallas_src>
import jax
import jax.numpy as jnp
from jax.experimental import pallas as pl
from jax.experimental.pallas import tpu as pltpu

_BN_EPS = 1e-5
_OUT_LANES = 128  # lane-dense output width


def _round_up(x, m):
    return ((x + m - 1) // m) * m


# ------------------------------------------------------------------ kernels

def _bn1_fc1_kernel(x_ref, mu1_ref, inv1_ref, w1_ref, b1_ref, h1_ref):
    """h1 = relu( bn1(state) @ W1 + b1 )  for one batch tile."""
    x = x_ref[...].astype(jnp.float32)
    xc = x - mu1_ref[...]                 # centered once, reused
    xn = xc * inv1_ref[...]               # BN normalize in f32
    h1 = jnp.dot(xn.astype(jnp.bfloat16), w1_ref[...],
                 preferred_element_type=jnp.float32) + b1_ref[...]
    h1_ref[...] = jnp.maximum(h1, 0.0)


def _bn2_fc2_fc3_kernel(h1_ref, a_ref, mu2_ref, inv2_ref,
                        w2x_ref, w2a_ref, b2_ref, w3_ref, b3_ref, out_ref):
    """q = fc3( relu( fc2( cat(bn2(h1), action) ) ) )  for one batch tile."""
    h1 = h1_ref[...]
    hc = h1 - mu2_ref[...]                # centered once, reused
    hn = hc * inv2_ref[...]

    # x-part of the concat on the MXU (bf16 inputs, f32 accumulation).
    acc = jnp.dot(hn.astype(jnp.bfloat16), w2x_ref[...],
                  preferred_element_type=jnp.float32) + b2_ref[...]

    # action-part: K = action_size is tiny -> broadcast FMAs on the VPU
    # instead of a zero-padded MXU pass (static small unroll).
    a = a_ref[...].astype(jnp.float32)
    for j in range(a_ref.shape[1]):
        acc = acc + a[:, j:j + 1] * w2a_ref[j:j + 1, :]

    h2 = jnp.maximum(acc, 0.0)

    # fc3 (N=1) as VPU multiply + XLU lane reduction (no MXU FIFO drain).
    q = jnp.sum(h2 * w3_ref[...], axis=-1, keepdims=True) + b3_ref[...]

    # Lane-dense output: replicate Q across lanes; wrapper slices [:, :1].
    out_ref[...] = jnp.broadcast_to(q, out_ref.shape)


# ------------------------------------------------------------------ wrapper

@jax.jit
def critic_forward(state, action, params):
    """state: [B, state_size] f32, action: [B, action_size] f32 -> Q: [B, 1]."""
    w1, b1, w2x, w2a, b2, w3_row, b3 = params
    B, S = state.shape
    A = action.shape[1]
    H1 = w1.shape[1]
    H2 = w2x.shape[1]

    # Batch tiling (sublane-aligned); pad the batch to a tile multiple.
    block_b = min(512, _round_up(B, 8))
    B_pad = _round_up(B, block_b)
    nb = B_pad // block_b
    if B_pad != B:
        pad = ((0, B_pad - B), (0, 0))
        state_p = jnp.pad(state, pad)
        action_p = jnp.pad(action, pad)
    else:
        state_p, action_p = state, action

    # bn1 batch statistics (training mode, biased variance) over real rows.
    mu1 = jnp.mean(state, axis=0, keepdims=True)
    var1 = jnp.mean((state - mu1) ** 2, axis=0, keepdims=True)
    inv1 = jax.lax.rsqrt(var1 + _BN_EPS)

    # bf16 weights for the MXU (halves weight DMA / vreg pressure).
    w1_bf = w1.astype(jnp.bfloat16)
    w2x_bf = w2x.astype(jnp.bfloat16)

    parallel = pltpu.CompilerParams(dimension_semantics=("parallel",))

    # ---- pass 1: h1 = relu(fc1(bn1(state))) -------------------------------
    h1 = pl.pallas_call(
        _bn1_fc1_kernel,
        out_shape=jax.ShapeDtypeStruct((B_pad, H1), jnp.float32),
        grid=(nb,),
        in_specs=[
            pl.BlockSpec((block_b, S), lambda b: (b, 0)),   # state tile
            pl.BlockSpec((1, S), lambda b: (0, 0)),          # mu1
            pl.BlockSpec((1, S), lambda b: (0, 0)),          # inv_std1
            pl.BlockSpec((S, H1), lambda b: (0, 0)),          # W1 (resident)
            pl.BlockSpec((1, H1), lambda b: (0, 0)),          # b1
        ],
        out_specs=pl.BlockSpec((block_b, H1), lambda b: (b, 0)),
        compiler_params=parallel,
    )(state_p, mu1, inv1, w1_bf, b1)

    # bn2 batch statistics over the real (unpadded) rows only.
    h1_real = h1[:B]
    mu2 = jnp.mean(h1_real, axis=0, keepdims=True)
    var2 = jnp.mean((h1_real - mu2) ** 2, axis=0, keepdims=True)
    inv2 = jax.lax.rsqrt(var2 + _BN_EPS)

    # ---- pass 2: q = fc3(relu(fc2(cat(bn2(h1), action)))) -----------------
    q_wide = pl.pallas_call(
        _bn2_fc2_fc3_kernel,
        out_shape=jax.ShapeDtypeStruct((B_pad, _OUT_LANES), jnp.float32),
        grid=(nb,),
        in_specs=[
            pl.BlockSpec((block_b, H1), lambda b: (b, 0)),   # h1 tile
            pl.BlockSpec((block_b, A), lambda b: (b, 0)),    # action tile
            pl.BlockSpec((1, H1), lambda b: (0, 0)),          # mu2
            pl.BlockSpec((1, H1), lambda b: (0, 0)),          # inv_std2
            pl.BlockSpec((H1, H2), lambda b: (0, 0)),          # W2x (resident)
            pl.BlockSpec((A, H2), lambda b: (0, 0)),           # W2a (resident)
            pl.BlockSpec((1, H2), lambda b: (0, 0)),           # b2
            pl.BlockSpec((1, H2), lambda b: (0, 0)),           # w3 row
            pl.BlockSpec((1, 1), lambda b: (0, 0)),            # b3
        ],
        out_specs=pl.BlockSpec((block_b, _OUT_LANES), lambda b: (b, 0)),
        compiler_params=parallel,
    )(h1, action_p, mu2, inv2, w2x_bf, w2a, b2, w3_row, b3)

    return q_wide[:B, :1]


# ------------------------------------------------------------------ params

def init_critic_params(key, state_size, action_size,
                       fc1_units=256, fc2_units=128):
    """Deterministic init mirroring the PyTorch module's init ranges.

    PyTorch's hidden_init uses weight.size()[0] == out_features as the
    'fan_in' (a quirk of the reference code); we reproduce that.  Linear
    weights are stored pre-transposed as [in_features, out_features]; the fc3
    weight is stored as a (1, fc2_units) row.
    """
    k = jax.random.split(key, 6)

    lim1 = 1.0 / jnp.sqrt(jnp.float32(fc1_units))
    lim2 = 1.0 / jnp.sqrt(jnp.float32(fc2_units))
    lim3 = jnp.float32(3e-4)

    w1 = jax.random.uniform(k[0], (state_size, fc1_units), jnp.float32, -lim1, lim1)
    b1 = jax.random.uniform(k[1], (1, fc1_units), jnp.float32,
                            -1.0 / jnp.sqrt(jnp.float32(state_size)),
                            1.0 / jnp.sqrt(jnp.float32(state_size)))

    in2 = fc1_units + action_size
    w2_full = jax.random.uniform(k[2], (in2, fc2_units), jnp.float32, -lim2, lim2)
    w2x, w2a = w2_full[:fc1_units], w2_full[fc1_units:]
    b2 = jax.random.uniform(k[3], (1, fc2_units), jnp.float32,
                            -1.0 / jnp.sqrt(jnp.float32(in2)),
                            1.0 / jnp.sqrt(jnp.float32(in2)))

    w3_row = jax.random.uniform(k[4], (1, fc2_units), jnp.float32, -lim3, lim3)
    b3 = jax.random.uniform(k[5], (1, 1), jnp.float32,
                            -1.0 / jnp.sqrt(jnp.float32(fc2_units)),
                            1.0 / jnp.sqrt(jnp.float32(fc2_units)))

    return (w1, b1, w2x, w2a, b2, w3_row, b3)


def critic_reference(state, action, params):
    """Pure-JAX reference with the same (bf16-MXU, f32-BN) numerics."""
    w1, b1, w2x, w2a, b2, w3_row, b3 = params
    mu1 = state.mean(0, keepdims=True)
    var1 = ((state - mu1) ** 2).mean(0, keepdims=True)
    xn = (state - mu1) * jax.lax.rsqrt(var1 + _BN_EPS)
    h1 = jnp.maximum(
        jnp.dot(xn.astype(jnp.bfloat16), w1.astype(jnp.bfloat16),
                preferred_element_type=jnp.float32) + b1, 0.0)
    mu2 = h1.mean(0, keepdims=True)
    var2 = ((h1 - mu2) ** 2).mean(0, keepdims=True)
    hn = (h1 - mu2) * jax.lax.rsqrt(var2 + _BN_EPS)
    a_part = jnp.sum(action[:, :, None] * w2a[None, :, :], axis=1)
    h2 = jnp.maximum(
        jnp.dot(hn.astype(jnp.bfloat16), w2x.astype(jnp.bfloat16),
                preferred_element_type=jnp.float32) + a_part + b2, 0.0)
    return jnp.sum(h2 * w3_row, axis=-1, keepdims=True) + b3


if __name__ == "__main__":
    B, STATE_SIZE, ACTION_SIZE = 8, 16, 4
    FC1, FC2 = 256, 128

    key = jax.random.PRNGKey(0)
    k_state, k_action, k_params = jax.random.split(key, 3)

    state = jax.random.normal(k_state, (B, STATE_SIZE), jnp.float32)
    action = jax.random.normal(k_action, (B, ACTION_SIZE), jnp.float32)
    params = init_critic_params(k_params, STATE_SIZE, ACTION_SIZE, FC1, FC2)

    q = critic_forward(state, action, params)
    q = jax.block_until_ready(q)

    q_ref = critic_reference(state, action, params)
    assert q.shape == (B, 1)
    assert jnp.allclose(q, q_ref, atol=1e-3, rtol=1e-3), "mismatch vs reference"

    print("KERNEL_OK")
</pallas_src>

<mosaic_0001>
module attributes {stable_mosaic.version = 11 : i64} {
  func.func @_bn1_fc1_kernel(%arg0: i32, %arg1: memref<8x16xf32, #tpu.memory_space<vmem>>, %arg2: memref<1x16xf32, #tpu.memory_space<vmem>>, %arg3: memref<1x16xf32, #tpu.memory_space<vmem>>, %arg4: memref<16x256xbf16, #tpu.memory_space<vmem>>, %arg5: memref<1x256xf32, #tpu.memory_space<vmem>>, %arg6: memref<8x256xf32, #tpu.memory_space<vmem>>) attributes {dimension_semantics = [#tpu.dimension_semantics<parallel>], iteration_bounds = array<i64: 1>, scalar_prefetch = 0 : i64, scratch_operands = 0 : i64, tpu.core_type = #tpu.core_type<tc>, window_params = [{transform_indices = @transform_0, window_bounds = array<i64: 8, 16>}, {pipeline_mode = #tpu.pipeline_mode<synchronous>, transform_indices = @transform_1, window_bounds = array<i64: 1, 16>}, {pipeline_mode = #tpu.pipeline_mode<synchronous>, transform_indices = @transform_2, window_bounds = array<i64: 1, 16>}, {pipeline_mode = #tpu.pipeline_mode<synchronous>, transform_indices = @transform_3, window_bounds = array<i64: 16, 256>}, {pipeline_mode = #tpu.pipeline_mode<synchronous>, transform_indices = @transform_4, window_bounds = array<i64: 1, 256>}, {transform_indices = @transform_5, window_bounds = array<i64: 8, 256>}]} {
    %c0 = arith.constant 0 : index
    %c0_0 = arith.constant 0 : index
    %0 = vector.load %arg1[%c0, %c0_0] : memref<8x16xf32, #tpu.memory_space<vmem>>, vector<8x16xf32>
    %c0_1 = arith.constant 0 : index
    %c0_2 = arith.constant 0 : index
    %1 = vector.load %arg2[%c0_1, %c0_2] : memref<1x16xf32, #tpu.memory_space<vmem>>, vector<1x16xf32>
    %2 = vector.broadcast %1 : vector<1x16xf32> to vector<8x16xf32>
    %3 = arith.subf %0, %2 : vector<8x16xf32>
    %c0_3 = arith.constant 0 : index
    %c0_4 = arith.constant 0 : index
    %4 = vector.load %arg3[%c0_3, %c0_4] : memref<1x16xf32, #tpu.memory_space<vmem>>, vector<1x16xf32>
    %5 = vector.broadcast %4 : vector<1x16xf32> to vector<8x16xf32>
    %6 = arith.mulf %3, %5 : vector<8x16xf32>
    %7 = arith.truncf %6 : vector<8x16xf32> to vector<8x16xbf16>
    %c0_5 = arith.constant 0 : index
    %c0_6 = arith.constant 0 : index
    %8 = vector.load %arg4[%c0_5, %c0_6] : memref<16x256xbf16, #tpu.memory_space<vmem>>, vector<16x256xbf16>
    %cst = arith.constant dense<0.000000e+00> : vector<8x256xf32>
    %9 = tpu.matmul %7, %8, %cst {dimension_numbers = #tpu.dot_dimension_numbers<[1], [0], [0], [1], [0, 0, 1, 1], [], []>} : vector<8x16xbf16>, vector<16x256xbf16>, vector<8x256xf32> -> vector<8x256xf32>
    %c0_7 = arith.constant 0 : index
    %c0_8 = arith.constant 0 : index
    %10 = vector.load %arg5[%c0_7, %c0_8] : memref<1x256xf32, #tpu.memory_space<vmem>>, vector<1x256xf32>
    %11 = vector.broadcast %10 : vector<1x256xf32> to vector<8x256xf32>
    %12 = arith.addf %9, %11 : vector<8x256xf32>
    %cst_9 = arith.constant 0.000000e+00 : f32
    %13 = vector.broadcast %cst_9 : f32 to vector<8x256xf32>
    %14 = arith.maximumf %12, %13 : vector<8x256xf32>
    %c0_10 = arith.constant 0 : index
    %c0_11 = arith.constant 0 : index
    %15 = vector.load %arg6[%c0_10, %c0_11] : memref<8x256xf32, #tpu.memory_space<vmem>>, vector<8x256xf32>
    tpu.vector_store %arg6[%c0_10, %c0_11], %14 {strides = array<i32>} : memref<8x256xf32, #tpu.memory_space<vmem>>, vector<8x256xf32>,
    return
  }
  func.func @transform_0(%arg0: i32) -> (i32, i32) {
    %c0_i32 = arith.constant 0 : i32
    %c0_i32_0 = arith.constant 0 : i32
    return %arg0, %c0_i32 : i32, i32
  }
  func.func @transform_1(%arg0: i32) -> (i32, i32) {
    %c0_i32 = arith.constant 0 : i32
    %c0_i32_0 = arith.constant 0 : i32
    %c0_i32_1 = arith.constant 0 : i32
    return %c0_i32, %c0_i32_0 : i32, i32
  }
  func.func @transform_2(%arg0: i32) -> (i32, i32) {
    %c0_i32 = arith.constant 0 : i32
    %c0_i32_0 = arith.constant 0 : i32
    %c0_i32_1 = arith.constant 0 : i32
    return %c0_i32, %c0_i32_0 : i32, i32
  }
  func.func @transform_3(%arg0: i32) -> (i32, i32) {
    %c0_i32 = arith.constant 0 : i32
    %c0_i32_0 = arith.constant 0 : i32
    %c0_i32_1 = arith.constant 0 : i32
    return %c0_i32, %c0_i32_0 : i32, i32
  }
  func.func @transform_4(%arg0: i32) -> (i32, i32) {
    %c0_i32 = arith.constant 0 : i32
    %c0_i32_0 = arith.constant 0 : i32
    %c0_i32_1 = arith.constant 0 : i32
    return %c0_i32, %c0_i32_0 : i32, i32
  }
  func.func @transform_5(%arg0: i32) -> (i32, i32) {
    %c0_i32 = arith.constant 0 : i32
    %c0_i32_0 = arith.constant 0 : i32
    return %arg0, %c0_i32 : i32, i32
  }
}

module attributes {stable_mosaic.version = 11 : i64} {
  func.func @_bn2_fc2_fc3_kernel(%arg0: i32, %arg1: memref<8x256xf32, #tpu.memory_space<vmem>>, %arg2: memref<8x4xf32, #tpu.memory_space<vmem>>, %arg3: memref<1x256xf32, #tpu.memory_space<vmem>>, %arg4: memref<1x256xf32, #tpu.memory_space<vmem>>, %arg5: memref<256x128xbf16, #tpu.memory_space<vmem>>, %arg6: memref<4x128xf32, #tpu.memory_space<vmem>>, %arg7: memref<1x128xf32, #tpu.memory_space<vmem>>, %arg8: memref<1x128xf32, #tpu.memory_space<vmem>>, %arg9: memref<1x1xf32, #tpu.memory_space<vmem>>, %arg10: memref<8x128xf32, #tpu.memory_space<vmem>>) attributes {dimension_semantics = [#tpu.dimension_semantics<parallel>], iteration_bounds = array<i64: 1>, scalar_prefetch = 0 : i64, scratch_operands = 0 : i64, tpu.core_type = #tpu.core_type<tc>, window_params = [{transform_indices = @transform_0, window_bounds = array<i64: 8, 256>}, {transform_indices = @transform_1, window_bounds = array<i64: 8, 4>}, {pipeline_mode = #tpu.pipeline_mode<synchronous>, transform_indices = @transform_2, window_bounds = array<i64: 1, 256>}, {pipeline_mode = #tpu.pipeline_mode<synchronous>, transform_indices = @transform_3, window_bounds = array<i64: 1, 256>}, {pipeline_mode = #tpu.pipeline_mode<synchronous>, transform_indices = @transform_4, window_bounds = array<i64: 256, 128>}, {pipeline_mode = #tpu.pipeline_mode<synchronous>, transform_indices = @transform_5, window_bounds = array<i64: 4, 128>}, {pipeline_mode = #tpu.pipeline_mode<synchronous>, transform_indices = @transform_6, window_bounds = array<i64: 1, 128>}, {pipeline_mode = #tpu.pipeline_mode<synchronous>, transform_indices = @transform_7, window_bounds = array<i64: 1, 128>}, {pipeline_mode = #tpu.pipeline_mode<synchronous>, transform_indices = @transform_8, window_bounds = array<i64: 1, 1>}, {transform_indices = @transform_9, window_bounds = array<i64: 8, 128>}]} {
    %c0 = arith.constant 0 : index
    %c0_0 = arith.constant 0 : index
    %0 = vector.load %arg1[%c0, %c0_0] : memref<8x256xf32, #tpu.memory_space<vmem>>, vector<8x256xf32>
    %c0_1 = arith.constant 0 : index
    %c0_2 = arith.constant 0 : index
    %1 = vector.load %arg3[%c0_1, %c0_2] : memref<1x256xf32, #tpu.memory_space<vmem>>, vector<1x256xf32>
    %2 = vector.broadcast %1 : vector<1x256xf32> to vector<8x256xf32>
    %3 = arith.subf %0, %2 : vector<8x256xf32>
    %c0_3 = arith.constant 0 : index
    %c0_4 = arith.constant 0 : index
    %4 = vector.load %arg4[%c0_3, %c0_4] : memref<1x256xf32, #tpu.memory_space<vmem>>, vector<1x256xf32>
    %5 = vector.broadcast %4 : vector<1x256xf32> to vector<8x256xf32>
    %6 = arith.mulf %3, %5 : vector<8x256xf32>
    %7 = arith.truncf %6 : vector<8x256xf32> to vector<8x256xbf16>
    %c0_5 = arith.constant 0 : index
    %c0_6 = arith.constant 0 : index
    %8 = vector.load %arg5[%c0_5, %c0_6] : memref<256x128xbf16, #tpu.memory_space<vmem>>, vector<256x128xbf16>
    %cst = arith.constant dense<0.000000e+00> : vector<8x128xf32>
    %9 = tpu.matmul %7, %8, %cst {dimension_numbers = #tpu.dot_dimension_numbers<[1], [0], [0], [1], [0, 0, 1, 1], [], []>} : vector<8x256xbf16>, vector<256x128xbf16>, vector<8x128xf32> -> vector<8x128xf32>
    %c0_7 = arith.constant 0 : index
    %c0_8 = arith.constant 0 : index
    %10 = vector.load %arg7[%c0_7, %c0_8] : memref<1x128xf32, #tpu.memory_space<vmem>>, vector<1x128xf32>
    %11 = vector.broadcast %10 : vector<1x128xf32> to vector<8x128xf32>
    %12 = arith.addf %9, %11 : vector<8x128xf32>
    %c0_9 = arith.constant 0 : index
    %c0_10 = arith.constant 0 : index
    %13 = vector.load %arg2[%c0_9, %c0_10] : memref<8x4xf32, #tpu.memory_space<vmem>>, vector<8x4xf32>
    %14 = vector.extract_strided_slice %13 {offsets = [0, 0], sizes = [8, 1], strides = [1, 1]} : vector<8x4xf32> to vector<8x1xf32>
    %c0_11 = arith.constant 0 : index
    %c0_12 = arith.constant 0 : index
    %15 = vector.load %arg6[%c0_11, %c0_12] : memref<4x128xf32, #tpu.memory_space<vmem>>, vector<1x128xf32>
    %16 = vector.broadcast %14 : vector<8x1xf32> to vector<8x128xf32>
    %17 = vector.broadcast %15 : vector<1x128xf32> to vector<8x128xf32>
    %18 = arith.mulf %16, %17 : vector<8x128xf32>
    %19 = arith.addf %12, %18 : vector<8x128xf32>
    %20 = vector.extract_strided_slice %13 {offsets = [0, 1], sizes = [8, 1], strides = [1, 1]} : vector<8x4xf32> to vector<8x1xf32>
    %c1 = arith.constant 1 : index
    %c0_13 = arith.constant 0 : index
    %21 = vector.load %arg6[%c1, %c0_13] : memref<4x128xf32, #tpu.memory_space<vmem>>, vector<1x128xf32>
    %22 = vector.broadcast %20 : vector<8x1xf32> to vector<8x128xf32>
    %23 = vector.broadcast %21 : vector<1x128xf32> to vector<8x128xf32>
    %24 = arith.mulf %22, %23 : vector<8x128xf32>
    %25 = arith.addf %19, %24 : vector<8x128xf32>
    %26 = vector.extract_strided_slice %13 {offsets = [0, 2], sizes = [8, 1], strides = [1, 1]} : vector<8x4xf32> to vector<8x1xf32>
    %c2 = arith.constant 2 : index
    %c0_14 = arith.constant 0 : index
    %27 = vector.load %arg6[%c2, %c0_14] : memref<4x128xf32, #tpu.memory_space<vmem>>, vector<1x128xf32>
    %28 = vector.broadcast %26 : vector<8x1xf32> to vector<8x128xf32>
    %29 = vector.broadcast %27 : vector<1x128xf32> to vector<8x128xf32>
    %30 = arith.mulf %28, %29 : vector<8x128xf32>
    %31 = arith.addf %25, %30 : vector<8x128xf32>
    %32 = vector.extract_strided_slice %13 {offsets = [0, 3], sizes = [8, 1], strides = [1, 1]} : vector<8x4xf32> to vector<8x1xf32>
    %c3 = arith.constant 3 : index
    %c0_15 = arith.constant 0 : index
    %33 = vector.load %arg6[%c3, %c0_15] : memref<4x128xf32, #tpu.memory_space<vmem>>, vector<1x128xf32>
    %34 = vector.broadcast %32 : vector<8x1xf32> to vector<8x128xf32>
    %35 = vector.broadcast %33 : vector<1x128xf32> to vector<8x128xf32>
    %36 = arith.mulf %34, %35 : vector<8x128xf32>
    %37 = arith.addf %31, %36 : vector<8x128xf32>
    %cst_16 = arith.constant 0.000000e+00 : f32
    %38 = vector.broadcast %cst_16 : f32 to vector<8x128xf32>
    %39 = arith.maximumf %37, %38 : vector<8x128xf32>
    %c0_17 = arith.constant 0 : index
    %c0_18 = arith.constant 0 : index
    %40 = vector.load %arg8[%c0_17, %c0_18] : memref<1x128xf32, #tpu.memory_space<vmem>>, vector<1x128xf32>
    %41 = vector.broadcast %40 : vector<1x128xf32> to vector<8x128xf32>
    %42 = arith.mulf %39, %41 : vector<8x128xf32>
    %cst_19 = arith.constant dense<0.000000e+00> : vector<8xf32>
    %43 = vector.multi_reduction <add>, %42, %cst_19 [1] : vector<8x128xf32> to vector<8xf32>
    %44 = vector.shape_cast %43 : vector<8xf32> to vector<8x1xf32>
    %c0_20 = arith.constant 0 : index
    %c0_21 = arith.constant 0 : index
    %45 = vector.load %arg9[%c0_20, %c0_21] : memref<1x1xf32, #tpu.memory_space<vmem>>, vector<1x1xf32>
    %46 = vector.broadcast %45 : vector<1x1xf32> to vector<8x1xf32>
    %47 = arith.addf %44, %46 : vector<8x1xf32>
    %48 = vector.shape_cast %47 : vector<8x1xf32> to vector<8x1xf32>
    %49 = vector.broadcast %48 : vector<8x1xf32> to vector<8x128xf32>
    %c0_22 = arith.constant 0 : index
    %c0_23 = arith.constant 0 : index
    %50 = vector.load %arg10[%c0_22, %c0_23] : memref<8x128xf32, #tpu.memory_space<vmem>>, vector<8x128xf32>
    tpu.vector_store %arg10[%c0_22, %c0_23], %49 {strides = array<i32>} : memref<8x128xf32, #tpu.memory_space<vmem>>, vector<8x128xf32>,
    return
  }
  func.func @transform_0(%arg0: i32) -> (i32, i32) {
    %c0_i32 = arith.constant 0 : i32
    %c0_i32_0 = arith.constant 0 : i32
    return %arg0, %c0_i32 : i32, i32
  }
  func.func @transform_1(%arg0: i32) -> (i32, i32) {
    %c0_i32 = arith.constant 0 : i32
    %c0_i32_0 = arith.constant 0 : i32
    return %arg0, %c0_i32 : i32, i32
  }
  func.func @transform_2(%arg0: i32) -> (i32, i32) {
    %c0_i32 = arith.constant 0 : i32
    %c0_i32_0 = arith.constant 0 : i32
    %c0_i32_1 = arith.constant 0 : i32
    return %c0_i32, %c0_i32_0 : i32, i32
  }
  func.func @transform_3(%arg0: i32) -> (i32, i32) {
    %c0_i32 = arith.constant 0 : i32
    %c0_i32_0 = arith.constant 0 : i32
    %c0_i32_1 = arith.constant 0 : i32
    return %c0_i32, %c0_i32_0 : i32, i32
  }
  func.func @transform_4(%arg0: i32) -> (i32, i32) {
    %c0_i32 = arith.constant 0 : i32
    %c0_i32_0 = arith.constant 0 : i32
    %c0_i32_1 = arith.constant 0 : i32
    return %c0_i32, %c0_i32_0 : i32, i32
  }
  func.func @transform_5(%arg0: i32) -> (i32, i32) {
    %c0_i32 = arith.constant 0 : i32
    %c0_i32_0 = arith.constant 0 : i32
    %c0_i32_1 = arith.constant 0 : i32
    return %c0_i32, %c0_i32_0 : i32, i32
  }
  func.func @transform_6(%arg0: i32) -> (i32, i32) {
    %c0_i32 = arith.constant 0 : i32
    %c0_i32_0 = arith.constant 0 : i32
    %c0_i32_1 = arith.constant 0 : i32
    return %c0_i32, %c0_i32_0 : i32, i32
  }
  func.func @transform_7(%arg0: i32) -> (i32, i32) {
    %c0_i32 = arith.constant 0 : i32
    %c0_i32_0 = arith.constant 0 : i32
    %c0_i32_1 = arith.constant 0 : i32
    return %c0_i32, %c0_i32_0 : i32, i32
  }
  func.func @transform_8(%arg0: i32) -> (i32, i32) {
    %c0_i32 = arith.constant 0 : i32
    %c0_i32_0 = arith.constant 0 : i32
    %c0_i32_1 = arith.constant 0 : i32
    return %c0_i32, %c0_i32_0 : i32, i32
  }
  func.func @transform_9(%arg0: i32) -> (i32, i32) {
    %c0_i32 = arith.constant 0 : i32
    %c0_i32_0 = arith.constant 0 : i32
    return %arg0, %c0_i32 : i32, i32
  }
}

</mosaic_0001>

<llo_original>
// kernel: critic_forward.2
$region0: #{critic_forward.2}
  #allocation0 [shape = 'u32[]', space=smem, size = 0x4, offset = 0x4, fixed_abs, tag = 'smem constant byte address 0x4 - core index']
  #allocation1 [shape = 'u32[144,128]{1,0:T(1,128)}', space=vmem, size = 0x12000, scoped, tag = 'internal scratch']
  %s0 = inlined_call_operand.vmem [shape: f32[8,16], index: 0, kind: input, shape index: {}]
  %s1 = inlined_call_operand.vmem [shape: f32[1,16], index: 1, kind: input, shape index: {}]
  %s2 = inlined_call_operand.vmem [shape: f32[1,16], index: 2, kind: input, shape index: {}]
  %s3 = inlined_call_operand.vmem [shape: bf16[16,256], index: 3, kind: input, shape index: {}]
  %s4 = inlined_call_operand.vmem [shape: f32[1,256], index: 4, kind: input, shape index: {}]
  %s5 = inlined_call_operand.vmem [shape: f32[8,256], index: 5, kind: output, shape index: {}]
  %s6 = sld [smem:[#allocation0]]
  $region30: #{critic_forward.2} parent=0
    _
  %s8 = ssub.s32 1, %s6
  %s9 = scalar_select 0, %s8, %s6
  // Predicated region
  $region2: #{critic_forward.2} parent=0 // pred_check
    _
  $region3: #{critic_forward.2} parent=0 // pred_check_branch
    %11 = sbr.rel (0) target = $region5
  $region4: #{critic_forward.2} parent=0 // pred_region
    _
  $region5: #{critic_forward.2} parent=0 // pred_fallthru
    _
  // Predicated region
  $region6: #{critic_forward.2} parent=0 // pred_check
    _
  $region7: #{critic_forward.2} parent=0 // pred_check_branch
    %13 = sbr.rel (0) target = $region9
  $region8: #{critic_forward.2} parent=0 // pred_region
    _
  $region9: #{critic_forward.2} parent=0 // pred_fallthru
    _
  // Predicated region
  $region10: #{critic_forward.2} parent=0 // pred_check
    _
  $region11: #{critic_forward.2} parent=0 // pred_check_branch
    %15 = sbr.rel (0) target = $region13
  $region12: #{critic_forward.2} parent=0 // pred_region
    _
  $region13: #{critic_forward.2} parent=0 // pred_fallthru
    _
  // Predicated region
  $region14: #{critic_forward.2} parent=0 // pred_check
    _
  $region15: #{critic_forward.2} parent=0 // pred_check_branch
    %17 = sbr.rel (0) target = $region17
  $region16: #{critic_forward.2} parent=0 // pred_region
    _
  $region17: #{critic_forward.2} parent=0 // pred_fallthru
    _
  // Predicated region
  $region18: #{critic_forward.2} parent=0 // pred_check
    _
  $region19: #{critic_forward.2} parent=0 // pred_check_branch
    %19 = sbr.rel (0) target = $region21
  $region20: #{critic_forward.2} parent=0 // pred_region
    _
  $region21: #{critic_forward.2} parent=0 // pred_fallthru
    _
  %v21 = vld [vmem:[%s0] sm:$0xff]
  %v22 = vld [vmem:[%s1] sm:$0x1]
  %v24 = vlaneseq
  %v25 = vshrl.u32 %v24, 7
  %v26 = vsub.s32 0, %v25
  %v27 = vrot.slane %v22, %v26
  %v29 = vsub.f32 %v21, %v27
  %v30 = vld [vmem:[%s2] sm:$0x1]
  %v32 = vlaneseq
  %v33 = vshrl.u32 %v32, 7
  %v34 = vsub.s32 0, %v33
  %v35 = vrot.slane %v30, %v34
  %v37 = vmul.f32 %v29, %v35
  %v38 = vpack.c.bf16 %v37, %v37
  %v39 = vld [vmem:[%s3] sm:$0xff]
  %v40 = vld [vmem:[%s3 + $0x8] sm:$0xff]
  %v41 = vld [vmem:[%s4] sm:$0x3]
  %v43 = vlaneseq
  %v44 = vshrl.u32 %v43, 7
  %v45 = vsub.s32 0, %v44
  %v46 = vrot.slane %v41, %v45
  %v47 = vlaneseq
  %v48 = vshrl.u32 %v47, 7
  %v49 = vsub.s32 1, %v48
  %v50 = vrot.slane %v41, %v49
  %v55 = vunpack.c.l.b16 %v39
  %v56 = vunpack.c.h.b16 %v39
  %v57 = vunpack.c.l.b16 %v40
  %v58 = vunpack.c.h.b16 %v40
  %v59 = vpack.c.b16 %v57, %v55
  %v60 = vpack.c.b16 %v58, %v56
  %vm63 = vcmask 130048
  %v65 = vsel %vm63, %v38, 0
  %67 = vmatprep.subr.bf16.mxu0 %v60
  %68 = vmatpush1.bf16.msra.mxu0 %v59
  %69 = vmatprep.subr.bf16.mxu0 0
  %70 = vmatpush1.bf16.msra.mxu0 0
  %71 = vmatprep.subr.bf16.mxu0 0
  %72 = vmatpush1.bf16.msra.mxu0 0
  %73 = vmatprep.subr.bf16.mxu0 0
  %74 = vmatpush1.bf16.msra.mxu0 0
  %75 = vmatprep.subr.bf16.mxu0 0
  %76 = vmatpush1.bf16.msra.mxu0 0
  %77 = vmatprep.subr.bf16.mxu0 0
  %78 = vmatpush1.bf16.msra.mxu0 0
  %79 = vmatprep.subr.bf16.mxu0 0
  %80 = vmatpush1.bf16.msra.mxu0 0
  %81 = vmatprep.subr.bf16.mxu0 0
  %82 = vmatpush1.bf16.msra.mxu0 0
  %83 = vmatprep.subr.bf16.mxu0 0
  %84 = vmatpush1.bf16.msra.mxu0 0
  %85 = vmatprep.subr.bf16.mxu0 0
  %86 = vmatpush1.bf16.msra.mxu0 0
  %87 = vmatprep.subr.bf16.mxu0 0
  %88 = vmatpush1.bf16.msra.mxu0 0
  %89 = vmatprep.subr.bf16.mxu0 0
  %90 = vmatpush1.bf16.msra.mxu0 0
  %91 = vmatprep.subr.bf16.mxu0 0
  %92 = vmatpush1.bf16.msra.mxu0 0
  %93 = vmatprep.subr.bf16.mxu0 0
  %94 = vmatpush1.bf16.msra.mxu0 0
  %95 = vmatprep.subr.bf16.mxu0 0
  %96 = vmatpush1.bf16.msra.mxu0 0
  %97 = vmatprep.subr.bf16.mxu0 0
  %98 = vmatpush1.bf16.msra.mxu0 0
  %99 = vmatprep.mubr.bf16.mxu0 0
  %100 = vmatmul.mubr.bf16.gmra.mrb[0].mxu0 %v65
  %v101 = vpop.f32.mrb[0].mxu0
  %v102 = vadd.f32 %v46, %v101
  %v103 = vpop.f32.mrb[0].mxu0
  %v104 = vadd.f32 %v50, %v103
  %v105 = vpop.f32.mrb[0].mxu0
  %v106 = vpop.f32.mrb[0].mxu0
  %107 = vdwg.mxu0
  %v108 = vmax.f32 %v102, 0.0
  %v109 = vmax.f32 %v104, 0.0
  %110 = vst [vmem:[%s5] sm:$0xff] %v108
  %111 = vst [vmem:[%s5 + $0x8] sm:$0xff] %v109
  // Predicated region
  $region22: #{critic_forward.2} parent=0 // pred_check
    _
  $region23: #{critic_forward.2} parent=0 // pred_check_branch
    %113 = sbr.rel (0) target = $region25
  $region24: #{critic_forward.2} parent=0 // pred_region
    _
  $region25: #{critic_forward.2} parent=0 // pred_fallthru
    _
  // Predicated region
  $region26: #{critic_forward.2} parent=0 // pred_check
    _
  $region27: #{critic_forward.2} parent=0 // pred_check_branch
    %115 = sbr.rel (0) target = $region29
  $region28: #{critic_forward.2} parent=0 // pred_region
    _
  $region29: #{critic_forward.2} parent=0 // pred_fallthru
    _

// kernel: critic_forward.3
$region0: #{critic_forward.3}
  #allocation0 [shape = 'u32[]', space=smem, size = 0x4, offset = 0x4, fixed_abs, tag = 'smem constant byte address 0x4 - core index']
  #allocation1 [shape = 'u32[144,128]{1,0:T(1,128)}', space=vmem, size = 0x12000, scoped, tag = 'internal scratch']
  #allocation2 [shape = 'f32[1,1]{1,0:T(1,128)S(1)}', space=vmem, size = 0x200, scoped, tag = 'scoped memory for critic_forward.3']
  %s0 = inlined_call_operand.vmem [shape: f32[8,256], index: 0, kind: input, shape index: {}]
  %s1 = inlined_call_operand.vmem [shape: f32[8,4], index: 1, kind: input, shape index: {}]
  %s2 = inlined_call_operand.vmem [shape: f32[1,256], index: 2, kind: input, shape index: {}]
  %s3 = inlined_call_operand.vmem [shape: f32[1,256], index: 3, kind: input, shape index: {}]
  %s4 = inlined_call_operand.vmem [shape: bf16[256,128], index: 4, kind: input, shape index: {}]
  %s5 = inlined_call_operand.vmem [shape: f32[4,128], index: 5, kind: input, shape index: {}]
  %s6 = inlined_call_operand.vmem [shape: f32[1,128], index: 6, kind: input, shape index: {}]
  %s7 = inlined_call_operand.vmem [shape: f32[1,128], index: 7, kind: input, shape index: {}]
  %s8 = inlined_call_operand.<no memory space> [shape: f32[1,1], index: 8, kind: input, shape index: {}]
  %s9 = inlined_call_operand.vmem [shape: f32[8,128], index: 9, kind: output, shape index: {}]
  %s10 = sld [smem:[#allocation0]]
  $region46: #{critic_forward.3} parent=0
    _
  %s12 = ssub.s32 1, %s10
  %s13 = scalar_select 0, %s12, %s10
  %v14 = vstv %s8
  %15 = vst [vmem:[#allocation2] sm:$0x1] %v14
  // Predicated region
  $region2: #{critic_forward.3} parent=0 // pred_check
    _
  $region3: #{critic_forward.3} parent=0 // pred_check_branch
    %17 = sbr.rel (0) target = $region5
  $region4: #{critic_forward.3} parent=0 // pred_region
    _
  $region5: #{critic_forward.3} parent=0 // pred_fallthru
    _
  // Predicated region
  $region6: #{critic_forward.3} parent=0 // pred_check
    _
  $region7: #{critic_forward.3} parent=0 // pred_check_branch
    %19 = sbr.rel (0) target = $region9
  $region8: #{critic_forward.3} parent=0 // pred_region
    _
  $region9: #{critic_forward.3} parent=0 // pred_fallthru
    _
  // Predicated region
  $region10: #{critic_forward.3} parent=0 // pred_check
    _
  $region11: #{critic_forward.3} parent=0 // pred_check_branch
    %21 = sbr.rel (0) target = $region13
  $region12: #{critic_forward.3} parent=0 // pred_region
    _
  $region13: #{critic_forward.3} parent=0 // pred_fallthru
    _
  // Predicated region
  $region14: #{critic_forward.3} parent=0 // pred_check
    _
  $region15: #{critic_forward.3} parent=0 // pred_check_branch
    %23 = sbr.rel (0) target = $region17
  $region16: #{critic_forward.3} parent=0 // pred_region
    _
  $region17: #{critic_forward.3} parent=0 // pred_fallthru
    _
  // Predicated region
  $region18: #{critic_forward.3} parent=0 // pred_check
    _
  $region19: #{critic_forward.3} parent=0 // pred_check_branch
    %25 = sbr.rel (0) target = $region21
  $region20: #{critic_forward.3} parent=0 // pred_region
    _
  $region21: #{critic_forward.3} parent=0 // pred_fallthru
    _
  // Predicated region
  $region22: #{critic_forward.3} parent=0 // pred_check
    _
  $region23: #{critic_forward.3} parent=0 // pred_check_branch
    %27 = sbr.rel (0) target = $region25
  $region24: #{critic_forward.3} parent=0 // pred_region
    _
  $region25: #{critic_forward.3} parent=0 // pred_fallthru
    _
  // Predicated region
  $region26: #{critic_forward.3} parent=0 // pred_check
    _
  $region27: #{critic_forward.3} parent=0 // pred_check_branch
    %29 = sbr.rel (0) target = $region29
  $region28: #{critic_forward.3} parent=0 // pred_region
    _
  $region29: #{critic_forward.3} parent=0 // pred_fallthru
    _
  // Predicated region
  $region30: #{critic_forward.3} parent=0 // pred_check
    _
  $region31: #{critic_forward.3} parent=0 // pred_check_branch
    %31 = sbr.rel (0) target = $region33
  $region32: #{critic_forward.3} parent=0 // pred_region
    _
  $region33: #{critic_forward.3} parent=0 // pred_fallthru
    _
  // Predicated region
  $region34: #{critic_forward.3} parent=0 // pred_check
    _
  $region35: #{critic_forward.3} parent=0 // pred_check_branch
    %33 = sbr.rel (0) target = $region37
  $region36: #{critic_forward.3} parent=0 // pred_region
    _
  $region37: #{critic_forward.3} parent=0 // pred_fallthru
    _
  %v35 = vld [vmem:[%s0] sm:$0xff]
  %v36 = vld [vmem:[%s0 + $0x8] sm:$0xff]
  %v37 = vld [vmem:[%s2] sm:$0x3]
  %v39 = vlaneseq
  %v40 = vshrl.u32 %v39, 7
  %v41 = vsub.s32 0, %v40
  %v42 = vrot.slane %v37, %v41
  %v43 = vlaneseq
  %v44 = vshrl.u32 %v43, 7
  %v45 = vsub.s32 1, %v44
  %v46 = vrot.slane %v37, %v45
  %v49 = vsub.f32 %v35, %v42
  %v50 = vsub.f32 %v36, %v46
  %v51 = vld [vmem:[%s3] sm:$0x3]
  %v53 = vlaneseq
  %v54 = vshrl.u32 %v53, 7
  %v55 = vsub.s32 0, %v54
  %v56 = vrot.slane %v51, %v55
  %v57 = vlaneseq
  %v58 = vshrl.u32 %v57, 7
  %v59 = vsub.s32 1, %v58
  %v60 = vrot.slane %v51, %v59
  %v63 = vmul.f32 %v49, %v56
  %v64 = vmul.f32 %v50, %v60
  %v65 = vpack.c.bf16 %v63, %v63
  %v66 = vpack.c.bf16 %v64, %v64
  %v67 = vld [vmem:[%s4] sm:$0xf]
  %v68 = vld [vmem:[%s4 + $0x4] sm:$0xf]
  %v69 = vld [vmem:[%s4 + $0x8] sm:$0xf]
  %v70 = vld [vmem:[%s4 + $0xc] sm:$0xf]
  %v71 = vld [vmem:[%s4 + $0x10] sm:$0xf]
  %v72 = vld [vmem:[%s4 + $0x14] sm:$0xf]
  %v73 = vld [vmem:[%s4 + $0x18] sm:$0xf]
  %v74 = vld [vmem:[%s4 + $0x1c] sm:$0xf]
  %v75 = vld [vmem:[%s4 + $0x20] sm:$0xf]
  %v76 = vld [vmem:[%s4 + $0x24] sm:$0xf]
  %v77 = vld [vmem:[%s4 + $0x28] sm:$0xf]
  %v78 = vld [vmem:[%s4 + $0x2c] sm:$0xf]
  %v79 = vld [vmem:[%s4 + $0x30] sm:$0xf]
  %v80 = vld [vmem:[%s4 + $0x34] sm:$0xf]
  %v81 = vld [vmem:[%s4 + $0x38] sm:$0xf]
  %v82 = vld [vmem:[%s4 + $0x3c] sm:$0xf]
  %v83 = vld [vmem:[%s4 + $0x40] sm:$0xf]
  %v84 = vld [vmem:[%s4 + $0x44] sm:$0xf]
  %v85 = vld [vmem:[%s4 + $0x48] sm:$0xf]
  %v86 = vld [vmem:[%s4 + $0x4c] sm:$0xf]
  %v87 = vld [vmem:[%s4 + $0x50] sm:$0xf]
  %v88 = vld [vmem:[%s4 + $0x54] sm:$0xf]
  %v89 = vld [vmem:[%s4 + $0x58] sm:$0xf]
  %v90 = vld [vmem:[%s4 + $0x5c] sm:$0xf]
  %v91 = vld [vmem:[%s4 + $0x60] sm:$0xf]
  %v92 = vld [vmem:[%s4 + $0x64] sm:$0xf]
  %v93 = vld [vmem:[%s4 + $0x68] sm:$0xf]
  %v94 = vld [vmem:[%s4 + $0x6c] sm:$0xf]
  %v95 = vld [vmem:[%s4 + $0x70] sm:$0xf]
  %v96 = vld [vmem:[%s4 + $0x74] sm:$0xf]
  %v97 = vld [vmem:[%s4 + $0x78] sm:$0xf]
  %v98 = vld [vmem:[%s4 + $0x7c] sm:$0xf]
  %v99 = vld [vmem:[%s6] sm:$0x1]
  %v101 = vlaneseq
  %v102 = vshrl.u32 %v101, 7
  %v103 = vsub.s32 0, %v102
  %v104 = vrot.slane %v99, %v103
  %v138 = vunpack.c.l.b16 %v67
  %v139 = vunpack.c.l.b16 %v68
  %v140 = vunpack.c.l.b16 %v69
  %v141 = vunpack.c.l.b16 %v70
  %v142 = vunpack.c.l.b16 %v71
  %v143 = vunpack.c.l.b16 %v72
  %v144 = vunpack.c.l.b16 %v73
  %v145 = vunpack.c.l.b16 %v74
  %v146 = vunpack.c.l.b16 %v75
  %v147 = vunpack.c.l.b16 %v76
  %v148 = vunpack.c.l.b16 %v77
  %v149 = vunpack.c.l.b16 %v78
  %v150 = vunpack.c.l.b16 %v79
  %v151 = vunpack.c.l.b16 %v80
  %v152 = vunpack.c.l.b16 %v81
  %v153 = vunpack.c.l.b16 %v82
  %v154 = vunpack.c.l.b16 %v83
  %v155 = vunpack.c.l.b16 %v84
  %v156 = vunpack.c.l.b16 %v85
  %v157 = vunpack.c.l.b16 %v86
  %v158 = vunpack.c.l.b16 %v87
  %v159 = vunpack.c.l.b16 %v88
  %v160 = vunpack.c.l.b16 %v89
  %v161 = vunpack.c.l.b16 %v90
  %v162 = vunpack.c.l.b16 %v91
  %v163 = vunpack.c.l.b16 %v92
  %v164 = vunpack.c.l.b16 %v93
  %v165 = vunpack.c.l.b16 %v94
  %v166 = vunpack.c.l.b16 %v95
  %v167 = vunpack.c.l.b16 %v96
  %v168 = vunpack.c.l.b16 %v97
  %v169 = vunpack.c.l.b16 %v98
  %v170 = vpack.c.b16 %v139, %v138
  %v171 = vpack.c.b16 %v141, %v140
  %v172 = vpack.c.b16 %v143, %v142
  %v173 = vpack.c.b16 %v145, %v144
  %v174 = vpack.c.b16 %v147, %v146
  %v175 = vpack.c.b16 %v149, %v148
  %v176 = vpack.c.b16 %v151, %v150
  %v177 = vpack.c.b16 %v153, %v152
  %v178 = vpack.c.b16 %v155, %v154
  %v179 = vpack.c.b16 %v157, %v156
  %v180 = vpack.c.b16 %v159, %v158
  %v181 = vpack.c.b16 %v161, %v160
  %v182 = vpack.c.b16 %v163, %v162
  %v183 = vpack.c.b16 %v165, %v164
  %v184 = vpack.c.b16 %v167, %v166
  %v185 = vpack.c.b16 %v169, %v168
  %202 = vmatprep.subr.bf16.mxu0 0
  %203 = vmatpush1.bf16.msra.mxu0 %v170
  %204 = vmatprep.subr.bf16.mxu0 0
  %205 = vmatpush1.bf16.msra.mxu0 %v171
  %206 = vmatprep.subr.bf16.mxu0 0
  %207 = vmatpush1.bf16.msra.mxu0 %v172
  %208 = vmatprep.subr.bf16.mxu0 0
  %209 = vmatpush1.bf16.msra.mxu0 %v173
  %210 = vmatprep.subr.bf16.mxu0 0
  %211 = vmatpush1.bf16.msra.mxu0 %v174
  %212 = vmatprep.subr.bf16.mxu0 0
  %213 = vmatpush1.bf16.msra.mxu0 %v175
  %214 = vmatprep.subr.bf16.mxu0 0
  %215 = vmatpush1.bf16.msra.mxu0 %v176
  %216 = vmatprep.subr.bf16.mxu0 0
  %217 = vmatpush1.bf16.msra.mxu0 %v177
  %218 = vmatprep.subr.bf16.mxu0 0
  %219 = vmatpush1.bf16.msra.mxu0 %v178
  %220 = vmatprep.subr.bf16.mxu0 0
  %221 = vmatpush1.bf16.msra.mxu0 %v179
  %222 = vmatprep.subr.bf16.mxu0 0
  %223 = vmatpush1.bf16.msra.mxu0 %v180
  %224 = vmatprep.subr.bf16.mxu0 0
  %225 = vmatpush1.bf16.msra.mxu0 %v181
  %226 = vmatprep.subr.bf16.mxu0 0
  %227 = vmatpush1.bf16.msra.mxu0 %v182
  %228 = vmatprep.subr.bf16.mxu0 0
  %229 = vmatpush1.bf16.msra.mxu0 %v183
  %230 = vmatprep.subr.bf16.mxu0 0
  %231 = vmatpush1.bf16.msra.mxu0 %v184
  %232 = vmatprep.subr.bf16.mxu0 0
  %233 = vmatpush1.bf16.msra.mxu0 %v185
  %234 = vmatprep.mubr.bf16.mxu0 %v66
  %235 = vmatmul.mubr.bf16.gmra.mrb[0].mxu0 %v65
  %v236 = vpop.f32.mrb[0].mxu0
  %v237 = vadd.f32 %v104, %v236
  %v238 = vpop.f32.mrb[0].mxu0
  %v239 = vpop.f32.mrb[0].mxu0
  %v240 = vpop.f32.mrb[0].mxu0
  %241 = vdwg.mxu0
  %v242 = vld [vmem:[%s1] sm:$0xff]
  %v243 = vld [vmem:[%s5] sm:$0x1]
  %245 = vset.pattern.permute.xlu0 0
  %246 = vperm.xlu0 %245, %v242
  %v247 = vpop.permute.xlu0 %246
  %v249 = vlaneseq
  %v250 = vshrl.u32 %v249, 7
  %v251 = vsub.s32 0, %v250
  %v252 = vrot.slane %v243, %v251
  %v253 = vmul.f32 %v247, %v252
  %v254 = vadd.f32 %v237, %v253
  %v255 = vld [vmem:[%s5 + $0x1] sm:$0x1]
  %256 = vset.pattern.permute.xlu0 1
  %257 = vperm.xlu0 %256, %v242
  %v258 = vpop.permute.xlu0 %257
  %v260 = vlaneseq
  %v261 = vshrl.u32 %v260, 7
  %v262 = vsub.s32 0, %v261
  %v263 = vrot.slane %v255, %v262
  %v264 = vmul.f32 %v258, %v263
  %v265 = vadd.f32 %v254, %v264
  %v266 = vld [vmem:[%s5 + $0x2] sm:$0x1]
  %267 = vset.pattern.permute.xlu0 2
  %268 = vperm.xlu0 %267, %v242
  %v269 = vpop.permute.xlu0 %268
  %v271 = vlaneseq
  %v272 = vshrl.u32 %v271, 7
  %v273 = vsub.s32 0, %v272
  %v274 = vrot.slane %v266, %v273
  %v275 = vmul.f32 %v269, %v274
  %v276 = vadd.f32 %v265, %v275
  %v277 = vld [vmem:[%s5 + $0x3] sm:$0x1]
  %278 = vset.pattern.permute.xlu0 3
  %279 = vperm.xlu0 %278, %v242
  %v280 = vpop.permute.xlu0 %279
  %v282 = vlaneseq
  %v283 = vshrl.u32 %v282, 7
  %v284 = vsub.s32 0, %v283
  %v285 = vrot.slane %v277, %v284
  %v286 = vmul.f32 %v280, %v285
  %v287 = vadd.f32 %v276, %v286
  %v288 = vmax.f32 %v287, 0.0
  %v289 = vld [vmem:[%s7] sm:$0x1]
  %v291 = vlaneseq
  %v292 = vshrl.u32 %v291, 7
  %v293 = vsub.s32 0, %v292
  %v294 = vrot.slane %v289, %v293
  %v296 = vmul.f32 %v288, %v294
  %297 = vadd.xlane.f32.xlu0 %v296
  %v298 = vpop.xlane.xlu0 %297
  %v299 = vld [vmem:[#allocation2] sm:$0x1]
  %v301 = vlaneseq
  %v302 = vshrl.u32 %v301, 7
  %v303 = vsub.s32 0, %v302
  %v304 = vrot.slane %v299, %v303
  %v306 = vadd.f32 %v298, %v304
  %308 = vset.pattern.permute.xlu0 0
  %309 = vperm.xlu0 %308, %v306
  %v310 = vpop.permute.xlu0 %309
  %312 = vst [vmem:[%s9] sm:$0xff] %v310
  // Predicated region
  $region38: #{critic_forward.3} parent=0 // pred_check
    _
  $region39: #{critic_forward.3} parent=0 // pred_check_branch
    %314 = sbr.rel (0) target = $region41
  $region40: #{critic_forward.3} parent=0 // pred_region
    _
  $region41: #{critic_forward.3} parent=0 // pred_fallthru
    _
  // Predicated region
  $region42: #{critic_forward.3} parent=0 // pred_check
    _
  $region43: #{critic_forward.3} parent=0 // pred_check_branch
    %316 = sbr.rel (0) target = $region45
  $region44: #{critic_forward.3} parent=0 // pred_region
    _
  $region45: #{critic_forward.3} parent=0 // pred_fallthru
    _

</llo_original>
